<compile_context>
chip_gen: v6e
topology: v6e:2x2x1
jax: 0.10.0
libtpu: 0.0.40
codegen_flags: <defaults>
</compile_context>

<pallas_src>
import functools

import jax
import jax.numpy as jnp
from jax import lax
from jax.experimental import pallas as pl
from jax.experimental.pallas import tpu as pltpu

BN_EPS = 1e-5


def _round_up(x, m):
    return (x + m - 1) // m * m


def _pad2(a, rows, cols):
    r, c = a.shape
    return jnp.pad(a, ((0, rows - r), (0, cols - c)))


def _clamp_vmem(nbytes):
    # Keep headroom for v7x (64 MiB physical VMEM); v5e/v6e have 128 MiB.
    return int(min(max(int(nbytes), 16 * 1024 * 1024), 48 * 1024 * 1024))


# ---------------------------------------------------------------------------
# Phase 1: h2 = ReLU(ReLU(x@W1+b1)@W2+b2) + masked partial BN statistics.
# ---------------------------------------------------------------------------
def _phase1_kernel(x_ref, w1_ref, b1_ref, w2_ref, b2_ref, h2_ref, stats_ref,
                   *, batch, block_b):
    i = pl.program_id(0)

    # Linear(init_dim, 32*td) + ReLU   (MXU matmul, f32 accumulation)
    h1 = jnp.dot(x_ref[...], w1_ref[...],
                 preferred_element_type=jnp.float32) + b1_ref[...]
    h1 = jnp.maximum(h1, 0.0)

    # Linear(32*td, 2*td) + ReLU
    h2 = jnp.dot(h1.astype(w2_ref.dtype), w2_ref[...],
                 preferred_element_type=jnp.float32) + b2_ref[...]
    h2 = jnp.maximum(h2, 0.0)
    h2_ref[...] = h2

    # Partial BatchNorm statistics for this batch tile; padded batch rows are
    # masked out so the full-batch statistics (restored in the wrapper) are exact.
    row = i * block_b + lax.broadcasted_iota(jnp.int32, (block_b, 1), 0)
    h2m = jnp.where(row < batch, h2, 0.0)
    s = jnp.sum(h2m, axis=0, keepdims=True)           # (1, H2p)
    ss = jnp.sum(h2m * h2m, axis=0, keepdims=True)    # (1, H2p)
    pad = jnp.zeros((6, s.shape[1]), jnp.float32)
    stats_ref[...] = jnp.concatenate([s, ss, pad], axis=0)   # rows: sum, sumsq


# ---------------------------------------------------------------------------
# Phase 2: out = h2 @ W3_eff + b_eff   (BatchNorm already folded into W3_eff).
# ---------------------------------------------------------------------------
def _phase2_kernel(h2_ref, w3_ref, b3_ref, out_ref):
    out_ref[...] = jnp.dot(h2_ref[...], w3_ref[...],
                           preferred_element_type=jnp.float32) + b3_ref[...]


def met_encoder(x, params, *, block_b=256, use_bf16=False):
    """x: (B, init_dim) f32.  params: tuple of 8 arrays (see init_params)."""
    w1, b1, w2, b2, gamma, beta, w3, b3 = params
    B, init_dim = x.shape
    h1_dim = w1.shape[1]
    h2_dim = w2.shape[1]
    td = w3.shape[1]

    # Lane-pad every feature dim to a multiple of 128; tile the batch (multiple of 8).
    Din = _round_up(init_dim, 128)
    H1 = _round_up(h1_dim, 128)
    H2 = _round_up(h2_dim, 128)
    TD = _round_up(td, 128)
    bb = _round_up(min(block_b, _round_up(B, 8)), 8)
    Bp = _round_up(B, bb)
    nt = Bp // bb

    f32 = jnp.float32
    xp = _pad2(x.astype(f32), Bp, Din)
    w1p = _pad2(w1.astype(f32), Din, H1)
    b1p = _pad2(b1.astype(f32), 1, H1)
    w2p = _pad2(w2.astype(f32), H1, H2)
    b2p = _pad2(b2.astype(f32), 1, H2)
    gp = _pad2(gamma.astype(f32), 1, H2)
    btp = _pad2(beta.astype(f32), 1, H2)
    w3p = _pad2(w3.astype(f32), H2, TD)
    b3p = _pad2(b3.astype(f32), 1, TD)

    if use_bf16:
        # bf16 operands for the two big matmuls (MXU fast path on v5e/v6e/v7x);
        # bias / ReLU / BN math and all accumulation stay in f32.
        xp = xp.astype(jnp.bfloat16)
        w1p = w1p.astype(jnp.bfloat16)
        w2p = w2p.astype(jnp.bfloat16)
    itm = 2 if use_bf16 else 4

    # --------------------------- phase 1 ---------------------------
    p1_flops = 2 * Bp * Din * H1 + 2 * Bp * H1 * H2
    p1_bytes = (Bp * Din * itm + Din * H1 * itm + H1 * 4 + H1 * H2 * itm + H2 * 4
                + Bp * H2 * 4 + nt * 8 * H2 * 4)
    p1_vmem = _clamp_vmem(
        2 * (bb * Din * itm + bb * H2 * 4 + 8 * H2 * 4)            # pipelined tiles
        + 2 * (Din * H1 * itm + H1 * 4 + H1 * H2 * itm + H2 * 4)   # resident weights
        + bb * H1 * 4                                              # h1 temporary
        + (2 << 20))

    h2_all, stats = pl.pallas_call(
        functools.partial(_phase1_kernel, batch=B, block_b=bb),
        grid=(nt,),
        in_specs=[
            pl.BlockSpec((bb, Din), lambda i: (i, 0)),
            pl.BlockSpec((Din, H1), lambda i: (0, 0)),   # weights: constant index
            pl.BlockSpec((1, H1), lambda i: (0, 0)),
            pl.BlockSpec((H1, H2), lambda i: (0, 0)),
            pl.BlockSpec((1, H2), lambda i: (0, 0)),
        ],
        out_specs=[
            pl.BlockSpec((bb, H2), lambda i: (i, 0)),
            pl.BlockSpec((8, H2), lambda i: (i, 0)),
        ],
        out_shape=[
            jax.ShapeDtypeStruct((Bp, H2), f32),
            jax.ShapeDtypeStruct((nt * 8, H2), f32),
        ],
        compiler_params=pltpu.CompilerParams(
            dimension_semantics=("parallel",),
            vmem_limit_bytes=p1_vmem),
        cost_estimate=pl.CostEstimate(
            flops=p1_flops, transcendentals=0, bytes_accessed=p1_bytes),
    )(xp, w1p, b1p, w2p, b2p)

    # ------- fold full-batch BatchNorm into the last Linear (tiny, runs once) -------
    stats = stats.reshape(nt, 8, H2)
    s = jnp.sum(stats[:, 0, :], axis=0)
    ss = jnp.sum(stats[:, 1, :], axis=0)
    mean = s / B
    var = jnp.maximum(ss / B - mean * mean, 0.0)        # biased variance (training BN)
    a = gp[0] * lax.rsqrt(var + BN_EPS)                 # (H2,)
    w3_eff = a[:, None] * w3p                           # (H2, TD)
    b_eff = (btp[0] - mean * a)[None, :] @ w3p + b3p    # (1, TD)

    # --------------------------- phase 2 ---------------------------
    p2_flops = 2 * Bp * H2 * TD
    p2_bytes = Bp * H2 * 4 + H2 * TD * 4 + TD * 4 + Bp * TD * 4
    p2_vmem = _clamp_vmem(
        2 * (bb * H2 * 4 + bb * TD * 4) + 2 * (H2 * TD * 4 + TD * 4) + (2 << 20))

    out = pl.pallas_call(
        _phase2_kernel,
        grid=(nt,),
        in_specs=[
            pl.BlockSpec((bb, H2), lambda i: (i, 0)),
            pl.BlockSpec((H2, TD), lambda i: (0, 0)),
            pl.BlockSpec((1, TD), lambda i: (0, 0)),
        ],
        out_specs=pl.BlockSpec((bb, TD), lambda i: (i, 0)),
        out_shape=jax.ShapeDtypeStruct((Bp, TD), f32),
        compiler_params=pltpu.CompilerParams(
            dimension_semantics=("parallel",),
            vmem_limit_bytes=p2_vmem),
        cost_estimate=pl.CostEstimate(
            flops=p2_flops, transcendentals=0, bytes_accessed=p2_bytes),
    )(h2_all, w3_eff, b_eff)

    return out[:B, :td]


def init_params(key, init_dim, target_dim):
    """Deterministic synthetic parameters with the shapes implied by __init__."""
    h1 = target_dim * 32
    h2 = target_dim * 2
    ks = jax.random.split(key, 8)
    w1 = jax.random.normal(ks[0], (init_dim, h1), jnp.float32) * 0.05
    b1 = jax.random.normal(ks[1], (1, h1), jnp.float32) * 0.05
    w2 = jax.random.normal(ks[2], (h1, h2), jnp.float32) * 0.05
    b2 = jax.random.normal(ks[3], (1, h2), jnp.float32) * 0.05
    gamma = 1.0 + 0.1 * jax.random.normal(ks[4], (1, h2), jnp.float32)
    beta = 0.1 * jax.random.normal(ks[5], (1, h2), jnp.float32)
    w3 = jax.random.normal(ks[6], (h2, target_dim), jnp.float32) * 0.05
    b3 = jax.random.normal(ks[7], (1, target_dim), jnp.float32) * 0.05
    return (w1, b1, w2, b2, gamma, beta, w3, b3)


def met_encoder_ref(x, params, *, use_bf16=False):
    """Pure-JAX reference (PyTorch BatchNorm1d training semantics)."""
    w1, b1, w2, b2, gamma, beta, w3, b3 = params
    if use_bf16:
        mm = lambda a, b: jnp.dot(a.astype(jnp.bfloat16), b.astype(jnp.bfloat16),
                                  preferred_element_type=jnp.float32)
    else:
        mm = lambda a, b: jnp.dot(a, b, preferred_element_type=jnp.float32)
    h1 = jnp.maximum(mm(x, w1) + b1, 0.0)
    h2 = jnp.maximum(mm(h1, w2) + b2, 0.0)
    mean = jnp.mean(h2, axis=0, keepdims=True)
    var = jnp.mean((h2 - mean) ** 2, axis=0, keepdims=True)
    h3 = (h2 - mean) / jnp.sqrt(var + BN_EPS) * gamma + beta
    return h3 @ w3 + b3


if __name__ == "__main__":
    B, init_dim, target_dim = 8, 16, 8   # hidden dims: 256 -> 16 -> 8

    key = jax.random.PRNGKey(0)
    kx, kp = jax.random.split(key)
    x = jax.random.normal(kx, (B, init_dim), jnp.float32)
    params = init_params(kp, init_dim, target_dim)

    run = jax.jit(met_encoder, static_argnames=("block_b", "use_bf16"))

    # f32 path: must match the module-exact reference tightly.
    out = jax.block_until_ready(run(x, params))
    ref = met_encoder_ref(x, params)
    assert out.shape == (B, target_dim)
    assert jnp.allclose(out, ref, atol=1e-4, rtol=1e-4), "f32 mismatch vs reference"

    # bf16-matmul fast path (v5e/v6e/v7x MXU), compared like-for-like against a
    # reference that also uses bf16 operands with f32 accumulation.
    out_bf16 = jax.block_until_ready(run(x, params, use_bf16=True))
    ref_bf16 = met_encoder_ref(x, params, use_bf16=True)
    assert out_bf16.shape == (B, target_dim)
    assert jnp.allclose(out_bf16, ref_bf16, atol=1e-2, rtol=1e-2), "bf16 mismatch vs reference"

    print("KERNEL_OK")
</pallas_src>

<mosaic_0001>
module attributes {stable_mosaic.version = 11 : i64} {
  func.func @_phase2_kernel(%arg0: i32, %arg1: memref<8x128xf32, #tpu.memory_space<vmem>>, %arg2: memref<128x128xf32, #tpu.memory_space<vmem>>, %arg3: memref<1x128xf32, #tpu.memory_space<vmem>>, %arg4: memref<8x128xf32, #tpu.memory_space<vmem>>) attributes {dimension_semantics = [#tpu.dimension_semantics<parallel>], iteration_bounds = array<i64: 1>, scalar_prefetch = 0 : i64, scratch_operands = 0 : i64, tpu.core_type = #tpu.core_type<tc>, window_params = [{transform_indices = @transform_0, window_bounds = array<i64: 8, 128>}, {pipeline_mode = #tpu.pipeline_mode<synchronous>, transform_indices = @transform_1, window_bounds = array<i64: 128, 128>}, {pipeline_mode = #tpu.pipeline_mode<synchronous>, transform_indices = @transform_2, window_bounds = array<i64: 1, 128>}, {transform_indices = @transform_3, window_bounds = array<i64: 8, 128>}]} {
    %c0 = arith.constant 0 : index
    %c0_0 = arith.constant 0 : index
    %0 = vector.load %arg1[%c0, %c0_0] : memref<8x128xf32, #tpu.memory_space<vmem>>, vector<8x128xf32>
    %c0_1 = arith.constant 0 : index
    %c0_2 = arith.constant 0 : index
    %1 = vector.load %arg2[%c0_1, %c0_2] : memref<128x128xf32, #tpu.memory_space<vmem>>, vector<128x128xf32>
    %cst = arith.constant dense<0.000000e+00> : vector<8x128xf32>
    %2 = tpu.matmul %0, %1, %cst {dimension_numbers = #tpu.dot_dimension_numbers<[1], [0], [0], [1], [0, 0, 1, 1], [], []>} : vector<8x128xf32>, vector<128x128xf32>, vector<8x128xf32> -> vector<8x128xf32>
    %c0_3 = arith.constant 0 : index
    %c0_4 = arith.constant 0 : index
    %3 = vector.load %arg3[%c0_3, %c0_4] : memref<1x128xf32, #tpu.memory_space<vmem>>, vector<1x128xf32>
    %4 = vector.broadcast %3 : vector<1x128xf32> to vector<8x128xf32>
    %5 = arith.addf %2, %4 : vector<8x128xf32>
    %c0_5 = arith.constant 0 : index
    %c0_6 = arith.constant 0 : index
    %6 = vector.load %arg4[%c0_5, %c0_6] : memref<8x128xf32, #tpu.memory_space<vmem>>, vector<8x128xf32>
    tpu.vector_store %arg4[%c0_5, %c0_6], %5 {strides = array<i32>} : memref<8x128xf32, #tpu.memory_space<vmem>>, vector<8x128xf32>,
    return
  }
  func.func @transform_0(%arg0: i32) -> (i32, i32) {
    %c0_i32 = arith.constant 0 : i32
    %c0_i32_0 = arith.constant 0 : i32
    return %arg0, %c0_i32 : i32, i32
  }
  func.func @transform_1(%arg0: i32) -> (i32, i32) {
    %c0_i32 = arith.constant 0 : i32
    %c0_i32_0 = arith.constant 0 : i32
    %c0_i32_1 = arith.constant 0 : i32
    return %c0_i32, %c0_i32_0 : i32, i32
  }
  func.func @transform_2(%arg0: i32) -> (i32, i32) {
    %c0_i32 = arith.constant 0 : i32
    %c0_i32_0 = arith.constant 0 : i32
    %c0_i32_1 = arith.constant 0 : i32
    return %c0_i32, %c0_i32_0 : i32, i32
  }
  func.func @transform_3(%arg0: i32) -> (i32, i32) {
    %c0_i32 = arith.constant 0 : i32
    %c0_i32_0 = arith.constant 0 : i32
    return %arg0, %c0_i32 : i32, i32
  }
}

module attributes {stable_mosaic.version = 11 : i64} {
  func.func @_phase1_kernel(%arg0: i32, %arg1: memref<8x128xf32, #tpu.memory_space<vmem>>, %arg2: memref<128x256xf32, #tpu.memory_space<vmem>>, %arg3: memref<1x256xf32, #tpu.memory_space<vmem>>, %arg4: memref<256x128xf32, #tpu.memory_space<vmem>>, %arg5: memref<1x128xf32, #tpu.memory_space<vmem>>, %arg6: memref<8x128xf32, #tpu.memory_space<vmem>>, %arg7: memref<8x128xf32, #tpu.memory_space<vmem>>) attributes {dimension_semantics = [#tpu.dimension_semantics<parallel>], iteration_bounds = array<i64: 1>, scalar_prefetch = 0 : i64, scratch_operands = 0 : i64, tpu.core_type = #tpu.core_type<tc>, window_params = [{transform_indices = @transform_0, window_bounds = array<i64: 8, 128>}, {pipeline_mode = #tpu.pipeline_mode<synchronous>, transform_indices = @transform_1, window_bounds = array<i64: 128, 256>}, {pipeline_mode = #tpu.pipeline_mode<synchronous>, transform_indices = @transform_2, window_bounds = array<i64: 1, 256>}, {pipeline_mode = #tpu.pipeline_mode<synchronous>, transform_indices = @transform_3, window_bounds = array<i64: 256, 128>}, {pipeline_mode = #tpu.pipeline_mode<synchronous>, transform_indices = @transform_4, window_bounds = array<i64: 1, 128>}, {transform_indices = @transform_5, window_bounds = array<i64: 8, 128>}, {transform_indices = @transform_6, window_bounds = array<i64: 8, 128>}]} {
    %c0 = arith.constant 0 : index
    %c0_0 = arith.constant 0 : index
    %0 = vector.load %arg1[%c0, %c0_0] : memref<8x128xf32, #tpu.memory_space<vmem>>, vector<8x128xf32>
    %c0_1 = arith.constant 0 : index
    %c0_2 = arith.constant 0 : index
    %1 = vector.load %arg2[%c0_1, %c0_2] : memref<128x256xf32, #tpu.memory_space<vmem>>, vector<128x256xf32>
    %cst = arith.constant dense<0.000000e+00> : vector<8x256xf32>
    %2 = tpu.matmul %0, %1, %cst {dimension_numbers = #tpu.dot_dimension_numbers<[1], [0], [0], [1], [0, 0, 1, 1], [], []>} : vector<8x128xf32>, vector<128x256xf32>, vector<8x256xf32> -> vector<8x256xf32>
    %c0_3 = arith.constant 0 : index
    %c0_4 = arith.constant 0 : index
    %3 = vector.load %arg3[%c0_3, %c0_4] : memref<1x256xf32, #tpu.memory_space<vmem>>, vector<1x256xf32>
    %4 = vector.broadcast %3 : vector<1x256xf32> to vector<8x256xf32>
    %5 = arith.addf %2, %4 : vector<8x256xf32>
    %cst_5 = arith.constant 0.000000e+00 : f32
    %6 = vector.broadcast %cst_5 : f32 to vector<8x256xf32>
    %7 = arith.maximumf %5, %6 : vector<8x256xf32>
    %c0_6 = arith.constant 0 : index
    %c0_7 = arith.constant 0 : index
    %8 = vector.load %arg4[%c0_6, %c0_7] : memref<256x128xf32, #tpu.memory_space<vmem>>, vector<256x128xf32>
    %cst_8 = arith.constant dense<0.000000e+00> : vector<8x128xf32>
    %9 = tpu.matmul %7, %8, %cst_8 {dimension_numbers = #tpu.dot_dimension_numbers<[1], [0], [0], [1], [0, 0, 1, 1], [], []>} : vector<8x256xf32>, vector<256x128xf32>, vector<8x128xf32> -> vector<8x128xf32>
    %c0_9 = arith.constant 0 : index
    %c0_10 = arith.constant 0 : index
    %10 = vector.load %arg5[%c0_9, %c0_10] : memref<1x128xf32, #tpu.memory_space<vmem>>, vector<1x128xf32>
    %11 = vector.broadcast %10 : vector<1x128xf32> to vector<8x128xf32>
    %12 = arith.addf %9, %11 : vector<8x128xf32>
    %cst_11 = arith.constant 0.000000e+00 : f32
    %13 = vector.broadcast %cst_11 : f32 to vector<8x128xf32>
    %14 = arith.maximumf %12, %13 : vector<8x128xf32>
    %c0_12 = arith.constant 0 : index
    %c0_13 = arith.constant 0 : index
    %15 = vector.load %arg6[%c0_12, %c0_13] : memref<8x128xf32, #tpu.memory_space<vmem>>, vector<8x128xf32>
    tpu.vector_store %arg6[%c0_12, %c0_13], %14 {strides = array<i32>} : memref<8x128xf32, #tpu.memory_space<vmem>>, vector<8x128xf32>,
    %c8_i32 = arith.constant 8 : i32
    %16 = arith.muli %arg0, %c8_i32 : i32
    %17 = tpu.iota {dimensions = array<i32: 0>} : vector<8x1xi32>
    %18 = vector.broadcast %16 : i32 to vector<8x1xi32>
    %19 = arith.addi %18, %17 : vector<8x1xi32>
    %c8_i32_14 = arith.constant 8 : i32
    %20 = vector.broadcast %c8_i32_14 : i32 to vector<8x1xi32>
    %21 = arith.cmpi slt, %19, %20 : vector<8x1xi32>
    %cst_15 = arith.constant 0.000000e+00 : f32
    %22 = vector.shape_cast %21 : vector<8x1xi1> to vector<8x1xi1>
    %23 = vector.broadcast %22 : vector<8x1xi1> to vector<8x128xi1>
    %24 = vector.broadcast %cst_15 : f32 to vector<8x128xf32>
    %25 = arith.select %23, %14, %24 : vector<8x128xi1>, vector<8x128xf32>
    %cst_16 = arith.constant dense<0.000000e+00> : vector<128xf32>
    %26 = vector.multi_reduction <add>, %25, %cst_16 [0] : vector<8x128xf32> to vector<128xf32>
    %27 = vector.shape_cast %26 : vector<128xf32> to vector<1x128xf32>
    %28 = arith.mulf %25, %25 : vector<8x128xf32>
    %cst_17 = arith.constant dense<0.000000e+00> : vector<128xf32>
    %29 = vector.multi_reduction <add>, %28, %cst_17 [0] : vector<8x128xf32> to vector<128xf32>
    %30 = vector.shape_cast %29 : vector<128xf32> to vector<1x128xf32>
    %cst_18 = arith.constant 0.000000e+00 : f32
    %31 = vector.broadcast %cst_18 : f32 to vector<6x128xf32>
    %32 = tpu.concatenate %27, %30, %31 in 0 : vector<1x128xf32>, vector<1x128xf32>, vector<6x128xf32> -> vector<8x128xf32>
    %c0_19 = arith.constant 0 : index
    %c0_20 = arith.constant 0 : index
    %33 = vector.load %arg7[%c0_19, %c0_20] : memref<8x128xf32, #tpu.memory_space<vmem>>, vector<8x128xf32>
    tpu.vector_store %arg7[%c0_19, %c0_20], %32 {strides = array<i32>} : memref<8x128xf32, #tpu.memory_space<vmem>>, vector<8x128xf32>,
    return
  }
  func.func @transform_0(%arg0: i32) -> (i32, i32) {
    %c0_i32 = arith.constant 0 : i32
    %c0_i32_0 = arith.constant 0 : i32
    return %arg0, %c0_i32 : i32, i32
  }
  func.func @transform_1(%arg0: i32) -> (i32, i32) {
    %c0_i32 = arith.constant 0 : i32
    %c0_i32_0 = arith.constant 0 : i32
    %c0_i32_1 = arith.constant 0 : i32
    return %c0_i32, %c0_i32_0 : i32, i32
  }
  func.func @transform_2(%arg0: i32) -> (i32, i32) {
    %c0_i32 = arith.constant 0 : i32
    %c0_i32_0 = arith.constant 0 : i32
    %c0_i32_1 = arith.constant 0 : i32
    return %c0_i32, %c0_i32_0 : i32, i32
  }
  func.func @transform_3(%arg0: i32) -> (i32, i32) {
    %c0_i32 = arith.constant 0 : i32
    %c0_i32_0 = arith.constant 0 : i32
    %c0_i32_1 = arith.constant 0 : i32
    return %c0_i32, %c0_i32_0 : i32, i32
  }
  func.func @transform_4(%arg0: i32) -> (i32, i32) {
    %c0_i32 = arith.constant 0 : i32
    %c0_i32_0 = arith.constant 0 : i32
    %c0_i32_1 = arith.constant 0 : i32
    return %c0_i32, %c0_i32_0 : i32, i32
  }
  func.func @transform_5(%arg0: i32) -> (i32, i32) {
    %c0_i32 = arith.constant 0 : i32
    %c0_i32_0 = arith.constant 0 : i32
    return %arg0, %c0_i32 : i32, i32
  }
  func.func @transform_6(%arg0: i32) -> (i32, i32) {
    %c0_i32 = arith.constant 0 : i32
    %c0_i32_0 = arith.constant 0 : i32
    return %arg0, %c0_i32 : i32, i32
  }
}

</mosaic_0001>

<llo_original>
// kernel: met_encoder.3
$region0: #{met_encoder.3}
  #allocation0 [shape = 'u32[]', space=smem, size = 0x4, offset = 0x4, fixed_abs, tag = 'smem constant byte address 0x4 - core index']
  #allocation1 [shape = 'u32[144,128]{1,0:T(1,128)}', space=vmem, size = 0x12000, scoped, tag = 'internal scratch']
  %s0 = inlined_call_operand.vmem [shape: f32[8,128], index: 0, kind: input, shape index: {}]
  %s1 = inlined_call_operand.vmem [shape: f32[128,128], index: 1, kind: input, shape index: {}]
  %s2 = inlined_call_operand.vmem [shape: f32[1,128], index: 2, kind: input, shape index: {}]
  %s3 = inlined_call_operand.hbm [shape: f32[8,128], index: 3, kind: output, shape index: {}]
  %s4 = sld [smem:[#allocation0]]
  $region22: #{met_encoder.3} parent=0
    _
  %s6 = ssub.s32 1, %s4
  %s7 = scalar_select 0, %s6, %s4
  $region1: #{met_encoder.3} parent=0
    #allocation2 [shape = 'u8[4096]{0}', space=vmem, size = 0x1000, scoped, tag = 'output window, operand 0, single buffered']
    #allocation3 [shape = 's32[1]{0}', space=sflag, size = 0x4, scoped, tag = 'scoped memory for met_encoder.3']
    %8 = vsyncpa [#allocation3], 0
    // Predicated region
    $region2: #{met_encoder.3} parent=1 // pred_check
      _
    $region3: #{met_encoder.3} parent=1 // pred_check_branch
      %10 = sbr.rel (0) target = $region5
    $region4: #{met_encoder.3} parent=1 // pred_region
      _
    $region5: #{met_encoder.3} parent=1 // pred_fallthru
      _
    // Predicated region
    $region6: #{met_encoder.3} parent=1 // pred_check
      _
    $region7: #{met_encoder.3} parent=1 // pred_check_branch
      %12 = sbr.rel (0) target = $region9
    $region8: #{met_encoder.3} parent=1 // pred_region
      _
    $region9: #{met_encoder.3} parent=1 // pred_fallthru
      _
    // Predicated region
    $region10: #{met_encoder.3} parent=1 // pred_check
      _
    $region11: #{met_encoder.3} parent=1 // pred_check_branch
      %14 = sbr.rel (0) target = $region13
    $region12: #{met_encoder.3} parent=1 // pred_region
      _
    $region13: #{met_encoder.3} parent=1 // pred_fallthru
      _
    %v15 = vld [vmem:[%s0] sm:$0xff]
    %v16 = vld [vmem:[%s1] sm:$0xff]
    %v17 = vld [vmem:[%s1 + $0x8] sm:$0xff]
    %v18 = vld [vmem:[%s1 + $0x10] sm:$0xff]
    %v19 = vld [vmem:[%s1 + $0x18] sm:$0xff]
    %v20 = vld [vmem:[%s1 + $0x20] sm:$0xff]
    %v21 = vld [vmem:[%s1 + $0x28] sm:$0xff]
    %v22 = vld [vmem:[%s1 + $0x30] sm:$0xff]
    %v23 = vld [vmem:[%s1 + $0x38] sm:$0xff]
    %v24 = vld [vmem:[%s1 + $0x40] sm:$0xff]
    %v25 = vld [vmem:[%s1 + $0x48] sm:$0xff]
    %v26 = vld [vmem:[%s1 + $0x50] sm:$0xff]
    %v27 = vld [vmem:[%s1 + $0x58] sm:$0xff]
    %v28 = vld [vmem:[%s1 + $0x60] sm:$0xff]
    %v29 = vld [vmem:[%s1 + $0x68] sm:$0xff]
    %v30 = vld [vmem:[%s1 + $0x70] sm:$0xff]
    %v31 = vld [vmem:[%s1 + $0x78] sm:$0xff]
    %v32 = vld [vmem:[%s2] sm:$0x1]
    %v34 = vlaneseq
    %v35 = vshrl.u32 %v34, 7
    %v36 = vsub.s32 0, %v35
    %v37 = vrot.slane %v32, %v36
    %39 = vmatprep.subr.mxu0 0.0
    %40 = vmatpush1.msra.mxu0 %v31
    %41 = vmatprep.subr.mxu0 0.0
    %42 = vmatpush1.msra.mxu0 %v30
    %43 = vmatprep.subr.mxu0 0.0
    %44 = vmatpush1.msra.mxu0 %v29
    %45 = vmatprep.subr.mxu0 0.0
    %46 = vmatpush1.msra.mxu0 %v28
    %47 = vmatprep.subr.mxu0 0.0
    %48 = vmatpush1.msra.mxu0 %v27
    %49 = vmatprep.subr.mxu0 0.0
    %50 = vmatpush1.msra.mxu0 %v26
    %51 = vmatprep.subr.mxu0 0.0
    %52 = vmatpush1.msra.mxu0 %v25
    %53 = vmatprep.subr.mxu0 0.0
    %54 = vmatpush1.msra.mxu0 %v24
    %55 = vmatprep.subr.mxu0 0.0
    %56 = vmatpush1.msra.mxu0 %v23
    %57 = vmatprep.subr.mxu0 0.0
    %58 = vmatpush1.msra.mxu0 %v22
    %59 = vmatprep.subr.mxu0 0.0
    %60 = vmatpush1.msra.mxu0 %v21
    %61 = vmatprep.subr.mxu0 0.0
    %62 = vmatpush1.msra.mxu0 %v20
    %63 = vmatprep.subr.mxu0 0.0
    %64 = vmatpush1.msra.mxu0 %v19
    %65 = vmatprep.subr.mxu0 0.0
    %66 = vmatpush1.msra.mxu0 %v18
    %67 = vmatprep.subr.mxu0 0.0
    %68 = vmatpush1.msra.mxu0 %v17
    %69 = vmatprep.subr.mxu0 0.0
    %70 = vmatpush1.msra.mxu0 %v16
    %71 = vmatprep.subr.mxu0 0.0
    %72 = vmatpush2.msra.mxu0 0.0
    %73 = vmatprep.subr.mxu0 0.0
    %74 = vmatpush2.msra.mxu0 0.0
    %75 = vmatprep.subr.mxu0 0.0
    %76 = vmatpush2.msra.mxu0 0.0
    %77 = vmatprep.subr.mxu0 0.0
    %78 = vmatpush2.msra.mxu0 0.0
    %79 = vmatprep.subr.mxu0 0.0
    %80 = vmatpush2.msra.mxu0 0.0
    %81 = vmatprep.subr.mxu0 0.0
    %82 = vmatpush2.msra.mxu0 0.0
    %83 = vmatprep.subr.mxu0 0.0
    %84 = vmatpush2.msra.mxu0 0.0
    %85 = vmatprep.subr.mxu0 0.0
    %86 = vmatpush2.msra.mxu0 0.0
    %87 = vmatprep.subr.mxu0 0.0
    %88 = vmatpush2.msra.mxu0 0.0
    %89 = vmatprep.subr.mxu0 0.0
    %90 = vmatpush2.msra.mxu0 0.0
    %91 = vmatprep.subr.mxu0 0.0
    %92 = vmatpush2.msra.mxu0 0.0
    %93 = vmatprep.subr.mxu0 0.0
    %94 = vmatpush2.msra.mxu0 0.0
    %95 = vmatprep.subr.mxu0 0.0
    %96 = vmatpush2.msra.mxu0 0.0
    %97 = vmatprep.subr.mxu0 0.0
    %98 = vmatpush2.msra.mxu0 0.0
    %99 = vmatprep.subr.mxu0 0.0
    %100 = vmatpush2.msra.mxu0 0.0
    %101 = vmatprep.subr.mxu0 0.0
    %102 = vmatpush2.msra.mxu0 0.0
    %103 = vmatprep.mubr.f32.mxu0 0.0
    %104 = vmatmul.mubr.f32.gmra.mxu0 %v15
    %v105 = vpop.f32.mrf.mxu0
    %v106 = vadd.f32 %v37, %v105
    %v107 = vpop.f32.mrf.mxu0
    %108 = vdwg.mxu0
    %109 = vst [vmem:[#allocation2] sm:$0xff] %v106
    // Predicated region
    $region14: #{met_encoder.3} parent=1 // pred_check
      _
    $region15: #{met_encoder.3} parent=1 // pred_check_branch
      %111 = sbr.rel (0) target = $region17
    $region16: #{met_encoder.3} parent=1 // pred_region
      %s113 = ssub.s32 128, 128
      %114 = vsyncadd [#allocation3], %s113
      %s116 = sshll.u32 [#allocation2], 4
      %s117 = int_to_ptr.vmem [resolvable:$true] %s116
      %119 = dma.vmem_to_hbm [thread:$0]  %s117, 128, %s3, [#allocation3]
    $region17: #{met_encoder.3} parent=1 // pred_fallthru
      _
    // Predicated region
    $region18: #{met_encoder.3} parent=1 // pred_check
      _
    $region19: #{met_encoder.3} parent=1 // pred_check_branch
      %121 = sbr.rel (0) target = $region21
    $region20: #{met_encoder.3} parent=1 // pred_region
      %122 = dma.done [#allocation3], 128
    $region21: #{met_encoder.3} parent=1 // pred_fallthru
      _
    %123 = vsyncpa [#allocation3], 1

// kernel: met_encoder.2
$region0: #{met_encoder.2}
  #allocation0 [shape = 'u32[]', space=smem, size = 0x4, offset = 0x4, fixed_abs, tag = 'smem constant byte address 0x4 - core index']
  #allocation1 [shape = 'u32[144,128]{1,0:T(1,128)}', space=vmem, size = 0x12000, scoped, tag = 'internal scratch']
  %s0 = inlined_call_operand.vmem [shape: f32[8,128], index: 0, kind: input, shape index: {}]
  %s1 = inlined_call_operand.vmem [shape: f32[128,256], index: 1, kind: input, shape index: {}]
  %s2 = inlined_call_operand.vmem [shape: f32[1,256], index: 2, kind: input, shape index: {}]
  %s3 = inlined_call_operand.vmem [shape: f32[256,128], index: 3, kind: input, shape index: {}]
  %s4 = inlined_call_operand.vmem [shape: f32[1,128], index: 4, kind: input, shape index: {}]
  %s5 = inlined_call_operand.vmem [shape: f32[8,128], index: 5, kind: output, shape index: {0}]
  %s6 = inlined_call_operand.vmem [shape: f32[8,128], index: 6, kind: output, shape index: {1}]
  %7 = xla_tuple %s5, %s6
  %s8 = sld [smem:[#allocation0]]
  $region38: #{met_encoder.2} parent=0
    _
  %s10 = ssub.s32 1, %s8
  %s11 = scalar_select 0, %s10, %s8
  // Predicated region
  $region2: #{met_encoder.2} parent=0 // pred_check
    _
  $region3: #{met_encoder.2} parent=0 // pred_check_branch
    %13 = sbr.rel (0) target = $region5
  $region4: #{met_encoder.2} parent=0 // pred_region
    _
  $region5: #{met_encoder.2} parent=0 // pred_fallthru
    _
  // Predicated region
  $region6: #{met_encoder.2} parent=0 // pred_check
    _
  $region7: #{met_encoder.2} parent=0 // pred_check_branch
    %15 = sbr.rel (0) target = $region9
  $region8: #{met_encoder.2} parent=0 // pred_region
    _
  $region9: #{met_encoder.2} parent=0 // pred_fallthru
    _
  // Predicated region
  $region10: #{met_encoder.2} parent=0 // pred_check
    _
  $region11: #{met_encoder.2} parent=0 // pred_check_branch
    %17 = sbr.rel (0) target = $region13
  $region12: #{met_encoder.2} parent=0 // pred_region
    _
  $region13: #{met_encoder.2} parent=0 // pred_fallthru
    _
  // Predicated region
  $region14: #{met_encoder.2} parent=0 // pred_check
    _
  $region15: #{met_encoder.2} parent=0 // pred_check_branch
    %19 = sbr.rel (0) target = $region17
  $region16: #{met_encoder.2} parent=0 // pred_region
    _
  $region17: #{met_encoder.2} parent=0 // pred_fallthru
    _
  // Predicated region
  $region18: #{met_encoder.2} parent=0 // pred_check
    _
  $region19: #{met_encoder.2} parent=0 // pred_check_branch
    %21 = sbr.rel (0) target = $region21
  $region20: #{met_encoder.2} parent=0 // pred_region
    _
  $region21: #{met_encoder.2} parent=0 // pred_fallthru
    _
  %v22 = vld [vmem:[%s0] sm:$0xff]
  %v23 = vld [vmem:[%s1] sm:$0xff]
  %v24 = vld [vmem:[%s1 + $0x8] sm:$0xff]
  %v25 = vld [vmem:[%s1 + $0x10] sm:$0xff]
  %v26 = vld [vmem:[%s1 + $0x18] sm:$0xff]
  %v27 = vld [vmem:[%s1 + $0x20] sm:$0xff]
  %v28 = vld [vmem:[%s1 + $0x28] sm:$0xff]
  %v29 = vld [vmem:[%s1 + $0x30] sm:$0xff]
  %v30 = vld [vmem:[%s1 + $0x38] sm:$0xff]
  %v31 = vld [vmem:[%s1 + $0x40] sm:$0xff]
  %v32 = vld [vmem:[%s1 + $0x48] sm:$0xff]
  %v33 = vld [vmem:[%s1 + $0x50] sm:$0xff]
  %v34 = vld [vmem:[%s1 + $0x58] sm:$0xff]
  %v35 = vld [vmem:[%s1 + $0x60] sm:$0xff]
  %v36 = vld [vmem:[%s1 + $0x68] sm:$0xff]
  %v37 = vld [vmem:[%s1 + $0x70] sm:$0xff]
  %v38 = vld [vmem:[%s1 + $0x78] sm:$0xff]
  %v39 = vld [vmem:[%s1 + $0x80] sm:$0xff]
  %v40 = vld [vmem:[%s1 + $0x88] sm:$0xff]
  %v41 = vld [vmem:[%s1 + $0x90] sm:$0xff]
  %v42 = vld [vmem:[%s1 + $0x98] sm:$0xff]
  %v43 = vld [vmem:[%s1 + $0xa0] sm:$0xff]
  %v44 = vld [vmem:[%s1 + $0xa8] sm:$0xff]
  %v45 = vld [vmem:[%s1 + $0xb0] sm:$0xff]
  %v46 = vld [vmem:[%s1 + $0xb8] sm:$0xff]
  %v47 = vld [vmem:[%s1 + $0xc0] sm:$0xff]
  %v48 = vld [vmem:[%s1 + $0xc8] sm:$0xff]
  %v49 = vld [vmem:[%s1 + $0xd0] sm:$0xff]
  %v50 = vld [vmem:[%s1 + $0xd8] sm:$0xff]
  %v51 = vld [vmem:[%s1 + $0xe0] sm:$0xff]
  %v52 = vld [vmem:[%s1 + $0xe8] sm:$0xff]
  %v53 = vld [vmem:[%s1 + $0xf0] sm:$0xff]
  %v54 = vld [vmem:[%s1 + $0xf8] sm:$0xff]
  %v55 = vld [vmem:[%s2] sm:$0x3]
  %v57 = vlaneseq
  %v58 = vshrl.u32 %v57, 7
  %v59 = vsub.s32 0, %v58
  %v60 = vrot.slane %v55, %v59
  %v61 = vlaneseq
  %v62 = vshrl.u32 %v61, 7
  %v63 = vsub.s32 1, %v62
  %v64 = vrot.slane %v55, %v63
  %67 = vmatprep.subr.mxu0 %v54
  %68 = vmatpush1.msra.mxu0 %v53
  %69 = vmatprep.subr.mxu0 %v52
  %70 = vmatpush1.msra.mxu0 %v51
  %71 = vmatprep.subr.mxu0 %v50
  %72 = vmatpush1.msra.mxu0 %v49
  %73 = vmatprep.subr.mxu0 %v48
  %74 = vmatpush1.msra.mxu0 %v47
  %75 = vmatprep.subr.mxu0 %v46
  %76 = vmatpush1.msra.mxu0 %v45
  %77 = vmatprep.subr.mxu0 %v44
  %78 = vmatpush1.msra.mxu0 %v43
  %79 = vmatprep.subr.mxu0 %v42
  %80 = vmatpush1.msra.mxu0 %v41
  %81 = vmatprep.subr.mxu0 %v40
  %82 = vmatpush1.msra.mxu0 %v39
  %83 = vmatprep.subr.mxu0 %v38
  %84 = vmatpush1.msra.mxu0 %v37
  %85 = vmatprep.subr.mxu0 %v36
  %86 = vmatpush1.msra.mxu0 %v35
  %87 = vmatprep.subr.mxu0 %v34
  %88 = vmatpush1.msra.mxu0 %v33
  %89 = vmatprep.subr.mxu0 %v32
  %90 = vmatpush1.msra.mxu0 %v31
  %91 = vmatprep.subr.mxu0 %v30
  %92 = vmatpush1.msra.mxu0 %v29
  %93 = vmatprep.subr.mxu0 %v28
  %94 = vmatpush1.msra.mxu0 %v27
  %95 = vmatprep.subr.mxu0 %v26
  %96 = vmatpush1.msra.mxu0 %v25
  %97 = vmatprep.subr.mxu0 %v24
  %98 = vmatpush1.msra.mxu0 %v23
  %99 = vmatprep.subr.mxu0 0.0
  %100 = vmatpush2.msra.mxu0 0.0
  %101 = vmatprep.subr.mxu0 0.0
  %102 = vmatpush2.msra.mxu0 0.0
  %103 = vmatprep.subr.mxu0 0.0
  %104 = vmatpush2.msra.mxu0 0.0
  %105 = vmatprep.subr.mxu0 0.0
  %106 = vmatpush2.msra.mxu0 0.0
  %107 = vmatprep.subr.mxu0 0.0
  %108 = vmatpush2.msra.mxu0 0.0
  %109 = vmatprep.subr.mxu0 0.0
  %110 = vmatpush2.msra.mxu0 0.0
  %111 = vmatprep.subr.mxu0 0.0
  %112 = vmatpush2.msra.mxu0 0.0
  %113 = vmatprep.subr.mxu0 0.0
  %114 = vmatpush2.msra.mxu0 0.0
  %115 = vmatprep.subr.mxu0 0.0
  %116 = vmatpush2.msra.mxu0 0.0
  %117 = vmatprep.subr.mxu0 0.0
  %118 = vmatpush2.msra.mxu0 0.0
  %119 = vmatprep.subr.mxu0 0.0
  %120 = vmatpush2.msra.mxu0 0.0
  %121 = vmatprep.subr.mxu0 0.0
  %122 = vmatpush2.msra.mxu0 0.0
  %123 = vmatprep.subr.mxu0 0.0
  %124 = vmatpush2.msra.mxu0 0.0
  %125 = vmatprep.subr.mxu0 0.0
  %126 = vmatpush2.msra.mxu0 0.0
  %127 = vmatprep.subr.mxu0 0.0
  %128 = vmatpush2.msra.mxu0 0.0
  %129 = vmatprep.subr.mxu0 0.0
  %130 = vmatpush2.msra.mxu0 0.0
  %131 = vmatprep.mubr.f32.mxu0 0.0
  %132 = vmatmul.mubr.f32.gmra.mxu0 %v22
  %v133 = vpop.f32.mrf.mxu0
  %v134 = vadd.f32 %v60, %v133
  %v135 = vpop.f32.mrf.mxu0
  %v136 = vadd.f32 %v64, %v135
  %137 = vdwg.mxu0
  %v138 = vmax.f32 %v134, 0.0
  %v139 = vmax.f32 %v136, 0.0
  %v140 = vld [vmem:[%s3] sm:$0xff]
  %v141 = vld [vmem:[%s3 + $0x8] sm:$0xff]
  %v142 = vld [vmem:[%s3 + $0x10] sm:$0xff]
  %v143 = vld [vmem:[%s3 + $0x18] sm:$0xff]
  %v144 = vld [vmem:[%s3 + $0x20] sm:$0xff]
  %v145 = vld [vmem:[%s3 + $0x28] sm:$0xff]
  %v146 = vld [vmem:[%s3 + $0x30] sm:$0xff]
  %v147 = vld [vmem:[%s3 + $0x38] sm:$0xff]
  %v148 = vld [vmem:[%s3 + $0x40] sm:$0xff]
  %v149 = vld [vmem:[%s3 + $0x48] sm:$0xff]
  %v150 = vld [vmem:[%s3 + $0x50] sm:$0xff]
  %v151 = vld [vmem:[%s3 + $0x58] sm:$0xff]
  %v152 = vld [vmem:[%s3 + $0x60] sm:$0xff]
  %v153 = vld [vmem:[%s3 + $0x68] sm:$0xff]
  %v154 = vld [vmem:[%s3 + $0x70] sm:$0xff]
  %v155 = vld [vmem:[%s3 + $0x78] sm:$0xff]
  %v156 = vld [vmem:[%s3 + $0x80] sm:$0xff]
  %v157 = vld [vmem:[%s3 + $0x88] sm:$0xff]
  %v158 = vld [vmem:[%s3 + $0x90] sm:$0xff]
  %v159 = vld [vmem:[%s3 + $0x98] sm:$0xff]
  %v160 = vld [vmem:[%s3 + $0xa0] sm:$0xff]
  %v161 = vld [vmem:[%s3 + $0xa8] sm:$0xff]
  %v162 = vld [vmem:[%s3 + $0xb0] sm:$0xff]
  %v163 = vld [vmem:[%s3 + $0xb8] sm:$0xff]
  %v164 = vld [vmem:[%s3 + $0xc0] sm:$0xff]
  %v165 = vld [vmem:[%s3 + $0xc8] sm:$0xff]
  %v166 = vld [vmem:[%s3 + $0xd0] sm:$0xff]
  %v167 = vld [vmem:[%s3 + $0xd8] sm:$0xff]
  %v168 = vld [vmem:[%s3 + $0xe0] sm:$0xff]
  %v169 = vld [vmem:[%s3 + $0xe8] sm:$0xff]
  %v170 = vld [vmem:[%s3 + $0xf0] sm:$0xff]
  %v171 = vld [vmem:[%s3 + $0xf8] sm:$0xff]
  %v172 = vld [vmem:[%s4] sm:$0x1]
  %v174 = vlaneseq
  %v175 = vshrl.u32 %v174, 7
  %v176 = vsub.s32 0, %v175
  %v177 = vrot.slane %v172, %v176
  %179 = vmatprep.subr.mxu0 0.0
  %180 = vmatpush1.msra.mxu0 %v155
  %181 = vmatprep.subr.mxu0 0.0
  %182 = vmatpush1.msra.mxu0 %v154
  %183 = vmatprep.subr.mxu0 0.0
  %184 = vmatpush1.msra.mxu0 %v153
  %185 = vmatprep.subr.mxu0 0.0
  %186 = vmatpush1.msra.mxu0 %v152
  %187 = vmatprep.subr.mxu0 0.0
  %188 = vmatpush1.msra.mxu0 %v151
  %189 = vmatprep.subr.mxu0 0.0
  %190 = vmatpush1.msra.mxu0 %v150
  %191 = vmatprep.subr.mxu0 0.0
  %192 = vmatpush1.msra.mxu0 %v149
  %193 = vmatprep.subr.mxu0 0.0
  %194 = vmatpush1.msra.mxu0 %v148
  %195 = vmatprep.subr.mxu0 0.0
  %196 = vmatpush1.msra.mxu0 %v147
  %197 = vmatprep.subr.mxu0 0.0
  %198 = vmatpush1.msra.mxu0 %v146
  %199 = vmatprep.subr.mxu0 0.0
  %200 = vmatpush1.msra.mxu0 %v145
  %201 = vmatprep.subr.mxu0 0.0
  %202 = vmatpush1.msra.mxu0 %v144
  %203 = vmatprep.subr.mxu0 0.0
  %204 = vmatpush1.msra.mxu0 %v143
  %205 = vmatprep.subr.mxu0 0.0
  %206 = vmatpush1.msra.mxu0 %v142
  %207 = vmatprep.subr.mxu0 0.0
  %208 = vmatpush1.msra.mxu0 %v141
  %209 = vmatprep.subr.mxu0 0.0
  %210 = vmatpush1.msra.mxu0 %v140
  %211 = vmatprep.subr.mxu0 0.0
  %212 = vmatpush2.msra.mxu0 %v171
  %213 = vmatprep.subr.mxu0 0.0
  %214 = vmatpush2.msra.mxu0 %v170
  %215 = vmatprep.subr.mxu0 0.0
  %216 = vmatpush2.msra.mxu0 %v169
  %217 = vmatprep.subr.mxu0 0.0
  %218 = vmatpush2.msra.mxu0 %v168
  %219 = vmatprep.subr.mxu0 0.0
  %220 = vmatpush2.msra.mxu0 %v167
  %221 = vmatprep.subr.mxu0 0.0
  %222 = vmatpush2.msra.mxu0 %v166
  %223 = vmatprep.subr.mxu0 0.0
  %224 = vmatpush2.msra.mxu0 %v165
  %225 = vmatprep.subr.mxu0 0.0
  %226 = vmatpush2.msra.mxu0 %v164
  %227 = vmatprep.subr.mxu0 0.0
  %228 = vmatpush2.msra.mxu0 %v163
  %229 = vmatprep.subr.mxu0 0.0
  %230 = vmatpush2.msra.mxu0 %v162
  %231 = vmatprep.subr.mxu0 0.0
  %232 = vmatpush2.msra.mxu0 %v161
  %233 = vmatprep.subr.mxu0 0.0
  %234 = vmatpush2.msra.mxu0 %v160
  %235 = vmatprep.subr.mxu0 0.0
  %236 = vmatpush2.msra.mxu0 %v159
  %237 = vmatprep.subr.mxu0 0.0
  %238 = vmatpush2.msra.mxu0 %v158
  %239 = vmatprep.subr.mxu0 0.0
  %240 = vmatpush2.msra.mxu0 %v157
  %241 = vmatprep.subr.mxu0 0.0
  %242 = vmatpush2.msra.mxu0 %v156
  %243 = vmatprep.mubr.f32.mxu0 %v139
  %244 = vmatmul.mubr.f32.gmra.mxu0 %v138
  %v245 = vpop.f32.mrf.mxu0
  %v246 = vadd.f32 %v177, %v245
  %v247 = vpop.f32.mrf.mxu0
  %248 = vdwg.mxu0
  %v249 = vmax.f32 %v246, 0.0
  %250 = vst [vmem:[%s5] sm:$0xff] %v249
  %s251 = smul.u32 0, 8
  %v252 = vlaneseq
  %v253 = vshrl.u32 %v252, 7
  %v254 = vstv %s251
  %v255 = vadd.s32 %v254, %v253
  %vm256 = vcmp.lt.s32.totalorder %v255, 8
  %v257 = vsel %vm256, 1, 0
  %vm258 = vcmp.eq.s32.totalorder %v257, 1
  %v259 = vsel %vm258, %v249, 0.0
  %v260 = vrot.slane %v259, 4
  %v261 = vadd.f32 %v259, %v260
  %v262 = vrot.slane %v261, 2
  %v263 = vadd.f32 %v261, %v262
  %v264 = vrot.slane %v263, 1
  %v265 = vadd.f32 %v263, %v264
  %v266 = vmul.f32 %v259, %v259
  %v267 = vrot.slane %v266, 4
  %v268 = vadd.f32 %v266, %v267
  %v269 = vrot.slane %v268, 2
  %v270 = vadd.f32 %v268, %v269
  %v271 = vrot.slane %v270, 1
  %v272 = vadd.f32 %v270, %v271
  %vm273 = vcmask 1040384
  %v274 = vsel %vm273, %v265, %v272
  %vm275 = vcmask 1041408
  %v276 = vsel %vm275, %v274, 0.0
  %277 = vst [vmem:[%s6] sm:$0xff] %v276
  // Predicated region
  $region22: #{met_encoder.2} parent=0 // pred_check
    _
  $region23: #{met_encoder.2} parent=0 // pred_check_branch
    %279 = sbr.rel (0) target = $region25
  $region24: #{met_encoder.2} parent=0 // pred_region
    _
  $region25: #{met_encoder.2} parent=0 // pred_fallthru
    _
  // Predicated region
  $region26: #{met_encoder.2} parent=0 // pred_check
    _
  $region27: #{met_encoder.2} parent=0 // pred_check_branch
    %281 = sbr.rel (0) target = $region29
  $region28: #{met_encoder.2} parent=0 // pred_region
    _
  $region29: #{met_encoder.2} parent=0 // pred_fallthru
    _
  // Predicated region
  $region30: #{met_encoder.2} parent=0 // pred_check
    _
  $region31: #{met_encoder.2} parent=0 // pred_check_branch
    %283 = sbr.rel (0) target = $region33
  $region32: #{met_encoder.2} parent=0 // pred_region
    _
  $region33: #{met_encoder.2} parent=0 // pred_fallthru
    _
  // Predicated region
  $region34: #{met_encoder.2} parent=0 // pred_check
    _
  $region35: #{met_encoder.2} parent=0 // pred_check_branch
    %285 = sbr.rel (0) target = $region37
  $region36: #{met_encoder.2} parent=0 // pred_region
    _
  $region37: #{met_encoder.2} parent=0 // pred_fallthru
    _

</llo_original>
